<compile_context>
chip_gen: v5e
topology: v5e:2x2
jax: 0.10.0
libtpu: 0.0.40
codegen_flags: <defaults>
</compile_context>

<pallas_src>
import functools
from typing import NamedTuple

import jax
import jax.numpy as jnp
from jax.experimental import pallas as pl
from jax.experimental.pallas import tpu as pltpu

_MiB = 1024 * 1024


def _round_up(n, m):
    return ((n + m - 1) // m) * m


@functools.lru_cache(maxsize=1)
def _tpu_info():
    """Returns (vmem_capacity_bytes, generation or None); conservative defaults."""
    cap = 64 * _MiB
    gen = None
    try:
        info = pltpu.get_tpu_info()
        cap = int(getattr(info, "vmem_capacity_bytes", cap))
        tag = ""
        for attr in ("chip_version", "version", "name", "generation"):
            v = getattr(info, attr, None)
            if v is not None:
                tag += str(v)
        for g in (7, 6, 5, 4):
            if str(g) in tag:
                gen = g
                break
    except Exception:
        pass
    return cap, gen


def _lane_mult(dim, gen):
    # v6e/v7x MXUs are 2x256x256; pad >=256 dims to 256 there, otherwise 128.
    return 256 if (gen is not None and gen >= 6 and dim >= 256) else 128


def _weight_spec(shape, index_map, single_buffer):
    """BlockSpec for an operand whose block index never changes across the grid."""
    if single_buffer:
        try:
            return pl.BlockSpec(shape, index_map, pipeline_mode=pl.Buffered(1))
        except Exception:
            pass  # older pallas without pipeline_mode / Buffered(1)
    return pl.BlockSpec(shape, index_map)


# ---------------------------------------------------------------------------
# Kernels
# ---------------------------------------------------------------------------

def _ffn_resident_kernel(x_ref, w1_ref, b1_ref, w2_ref, b2_ref, o_ref):
    """One row tile; full W1/W2 resident in VMEM.

    x_ref : (TM, D_p)  compute dtype (bf16)
    w1_ref: (D_p, H_p) compute dtype
    b1_ref: (1, H_p)   float32
    w2_ref: (H_p, D_p) compute dtype
    b2_ref: (1, D_p)   float32
    o_ref : (TM, D_p)  output dtype
    """
    # linear1 (f32 accumulate) with fused bias + ReLU + downcast epilogue so
    # the f32 hidden tile dies immediately (no f32 + bf16 copies live together).
    h = jnp.dot(x_ref[...], w1_ref[...], preferred_element_type=jnp.float32)
    h = jnp.maximum(h + b1_ref[...], 0.0).astype(w2_ref.dtype)
    # dropout: identity (inference mode).
    y = jnp.dot(h, w2_ref[...], preferred_element_type=jnp.float32) + b2_ref[...]
    o_ref[...] = y.astype(o_ref.dtype)


def _ffn_stream_kernel(x_ref, w1_ref, b1_ref, w2_ref, b2_ref, o_ref, acc_ref):
    """Hidden dim tiled on the last grid axis; second matmul accumulates."""
    h_idx = pl.program_id(1)

    @pl.when(h_idx == 0)
    def _():
        acc_ref[...] = jnp.zeros_like(acc_ref)

    h = jnp.dot(x_ref[...], w1_ref[...], preferred_element_type=jnp.float32)
    h = jnp.maximum(h + b1_ref[...], 0.0).astype(w2_ref.dtype)
    acc_ref[...] += jnp.dot(h, w2_ref[...], preferred_element_type=jnp.float32)

    @pl.when(h_idx == pl.num_programs(1) - 1)
    def _():
        o_ref[...] = (acc_ref[...] + b2_ref[...]).astype(o_ref.dtype)


# ---------------------------------------------------------------------------
# Wrapper
# ---------------------------------------------------------------------------

class FFNParams(NamedTuple):
    w1p: jax.Array   # (D_p, H_p) compute dtype
    b1p: jax.Array   # (1, H_p)   float32
    w2p: jax.Array   # (H_p, D_p) compute dtype
    b2p: jax.Array   # (1, D_p)   float32


def prepare_ffn_params(w1, b1, w2, b2, *, compute_dtype=jnp.bfloat16):
    """Pad + cast weights ONCE (hoisted out of the per-call path).

    Weights are stored transposed vs. PyTorch (kernel computes x @ W1 then @ W2).
    Zero padding is exact: padded hidden columns stay 0 through ReLU and padded
    output columns are sliced off by the caller.
    """
    D, H = w1.shape
    assert w2.shape == (H, D), (w1.shape, w2.shape)
    _, gen = _tpu_info()
    D_p = _round_up(D, _lane_mult(D, gen))
    H_p = _round_up(H, _lane_mult(H, gen))
    w1p = jnp.pad(w1, ((0, D_p - D), (0, H_p - H))).astype(compute_dtype)
    w2p = jnp.pad(w2, ((0, H_p - H), (0, D_p - D))).astype(compute_dtype)
    b1p = jnp.pad(jnp.reshape(b1, (1, H)).astype(jnp.float32),
                  ((0, 0), (0, H_p - H)))
    b2p = jnp.pad(jnp.reshape(b2, (1, D)).astype(jnp.float32),
                  ((0, 0), (0, D_p - D)))
    return FFNParams(w1p, b1p, w2p, b2p)


def feedforward_prepared(x, params, *, row_tile=None):
    """x: [B, S, D] -> [B, S, D] using pre-padded / pre-cast params."""
    B, S, D = x.shape
    D_p, H_p = params.w1p.shape
    assert params.w2p.shape == (H_p, D_p) and D <= D_p
    out_dtype = x.dtype
    compute_dtype = params.w1p.dtype
    cbytes = jnp.dtype(compute_dtype).itemsize
    obytes = jnp.dtype(out_dtype).itemsize

    cap, gen = _tpu_info()
    # VMEM ceiling with compiler-scratch headroom: ~56 MiB on 64-MiB v7x,
    # ~100 MiB on 128-MiB v5e/v6e (don't waste half the VMEM with a 64-MiB cap).
    budget = max(min(cap - 8 * _MiB, 100 * _MiB), 16 * _MiB)

    M = B * S
    sub = 16 if cbytes < 4 else 8       # bf16 packs 16 rows per sublane group
    max_rt = _round_up(M, sub)
    if gen == 7 and M >= 2 * sub:
        # v7x has 2 TensorCores/chip: force >= 2 row-grid steps so the
        # "parallel" row axis can actually shard across both cores.
        max_rt = _round_up(-(-M // 2), sub)

    rt = 256 if row_tile is None else row_tile
    rt = max(sub, min(_round_up(rt, sub), max_rt))

    def resident_bytes(rt_):
        return (2 * rt_ * D_p * cbytes              # x tiles (double-buffered)
                + 2 * rt_ * D_p * obytes            # out tiles (double-buffered)
                + (D_p * H_p + H_p * D_p) * cbytes  # W1 + W2 (single-buffered)
                + (H_p + D_p) * 4                   # biases
                + rt_ * H_p * (4 + cbytes)          # f32 dot result + bf16 cast
                + rt_ * D_p * 4)                    # f32 output before cast

    def stream_bytes(rt_, th):
        return (2 * rt_ * D_p * cbytes
                + 2 * rt_ * D_p * obytes
                + 2 * (D_p * th + th * D_p) * cbytes  # streamed W1/W2 blocks
                + 2 * (th + D_p) * 4
                + rt_ * th * (4 + cbytes)
                + 2 * rt_ * D_p * 4)                  # acc scratch + f32 epilogue

    use_resident = resident_bytes(rt) * 1.15 <= budget

    th = None
    if not use_resident:
        if row_tile is None:
            # Weights are re-streamed per row tile: size the tile so the MXU,
            # not the weight DMA, is the binding unit (flops/byte ~ rt).
            target = {5: 256, 6: 768, 7: 384}.get(gen, 512)
            rt = max(rt, min(_round_up(target, sub), max_rt))

        def pick_th(rt_):
            t = min(H_p, 2048)
            while t > 128 and (H_p % t != 0
                               or stream_bytes(rt_, t) * 1.15 > budget):
                t -= 128
            return max(t, 128)

        th = pick_th(rt)
        while stream_bytes(rt, th) * 1.15 > budget and rt > 2 * sub:
            rt = max(sub, _round_up(rt // 2, sub))
            th = pick_th(rt)

    M_p = _round_up(M, rt)
    x2d = jnp.pad(x.reshape(M, D),
                  ((0, M_p - M), (0, D_p - D))).astype(compute_dtype)

    def run(single_buffer_weights):
        if use_resident:
            grid = (M_p // rt,)
            in_specs = [
                pl.BlockSpec((rt, D_p), lambda i: (i, 0)),                        # x
                _weight_spec((D_p, H_p), lambda i: (0, 0), single_buffer_weights),  # W1
                _weight_spec((1, H_p), lambda i: (0, 0), single_buffer_weights),    # b1
                _weight_spec((H_p, D_p), lambda i: (0, 0), single_buffer_weights),  # W2
                _weight_spec((1, D_p), lambda i: (0, 0), single_buffer_weights),    # b2
            ]
            out_specs = pl.BlockSpec((rt, D_p), lambda i: (i, 0))
            scratch = []
            kernel = _ffn_resident_kernel
            semantics = ("parallel",)
        else:
            grid = (M_p // rt, H_p // th)
            in_specs = [
                pl.BlockSpec((rt, D_p), lambda i, h: (i, 0)),    # x (resident over h)
                pl.BlockSpec((D_p, th), lambda i, h: (0, h)),    # W1 slice (streamed)
                pl.BlockSpec((1, th), lambda i, h: (0, h)),      # b1 slice
                pl.BlockSpec((th, D_p), lambda i, h: (h, 0)),    # W2 slice (streamed)
                _weight_spec((1, D_p), lambda i, h: (0, 0), single_buffer_weights),  # b2
            ]
            out_specs = pl.BlockSpec((rt, D_p), lambda i, h: (i, 0))
            scratch = [pltpu.VMEM((rt, D_p), jnp.float32)]
            kernel = _ffn_stream_kernel
            semantics = ("parallel", "arbitrary")

        return pl.pallas_call(
            kernel,
            out_shape=jax.ShapeDtypeStruct((M_p, D_p), out_dtype),
            grid_spec=pltpu.PrefetchScalarGridSpec(
                num_scalar_prefetch=0,
                grid=grid,
                in_specs=in_specs,
                out_specs=out_specs,
                scratch_shapes=scratch,
            ),
            compiler_params=pltpu.CompilerParams(
                dimension_semantics=semantics,
                vmem_limit_bytes=int(budget),
            ),
        )(x2d, params.w1p, params.b1p, params.w2p, params.b2p)

    try:
        out2d = run(single_buffer_weights=True)
    except Exception:
        # Fallback for JAX builds that reject Buffered(1) on resident operands
        # (catchable here when called eagerly; under jit pass row_tile and let
        # default buffering apply).
        out2d = run(single_buffer_weights=False)

    return out2d[:M, :D].reshape(B, S, D)


def feedforward(x, w1, b1, w2, b2, *, dropout_rate=0.0, row_tile=None,
                compute_dtype=jnp.bfloat16):
    """Convenience wrapper matching the module signature.  For repeated calls,
    use prepare_ffn_params() once + feedforward_prepared() so the weight
    pad/cast HBM traffic is not paid every forward pass."""
    del dropout_rate  # inference-mode dropout == identity
    params = prepare_ffn_params(w1, b1, w2, b2, compute_dtype=compute_dtype)
    return feedforward_prepared(x, params, row_tile=row_tile)


def _init_params(key, model_dim, hidden_dim, dtype=jnp.float32):
    """Deterministic init matching nn.Linear (weights transposed vs. PyTorch)."""
    k1, k2, k3, k4 = jax.random.split(key, 4)
    lim1 = 1.0 / (model_dim ** 0.5)
    lim2 = 1.0 / (hidden_dim ** 0.5)
    w1 = jax.random.uniform(k1, (model_dim, hidden_dim), dtype, -lim1, lim1)
    b1 = jax.random.uniform(k2, (1, hidden_dim), dtype, -lim1, lim1)
    w2 = jax.random.uniform(k3, (hidden_dim, model_dim), dtype, -lim2, lim2)
    b2 = jax.random.uniform(k4, (1, model_dim), dtype, -lim2, lim2)
    return w1, b1, w2, b2


if __name__ == "__main__":
    key = jax.random.PRNGKey(0)
    kx, kp = jax.random.split(key)

    batch, seq, model_dim, hidden_dim = 2, 8, 128, 256
    x = jax.random.normal(kx, (batch, seq, model_dim), dtype=jnp.float32)
    w1, b1, w2, b2 = _init_params(kp, model_dim, hidden_dim)

    # Hoisted weight prep (pad + cast once), then the fused kernel.
    params = prepare_ffn_params(w1, b1, w2, b2)
    out = feedforward_prepared(x, params)
    out = jax.block_until_ready(out)
    assert out.shape == (batch, seq, model_dim)
    assert out.dtype == x.dtype

    # Reference mirroring the kernel's bf16-compute / f32-accumulate path.
    # (PyTorch's f32 Linear differs only by bf16 rounding; fine for inference.)
    xb = x.reshape(-1, model_dim).astype(jnp.bfloat16)
    h_ref = jnp.dot(xb, w1.astype(jnp.bfloat16),
                    preferred_element_type=jnp.float32) + b1
    h_ref = jnp.maximum(h_ref, 0.0)
    ref = jnp.dot(h_ref.astype(jnp.bfloat16), w2.astype(jnp.bfloat16),
                  preferred_element_type=jnp.float32) + b2
    ref = ref.reshape(batch, seq, model_dim).astype(x.dtype)

    assert jnp.allclose(out, ref, atol=2e-2, rtol=2e-2), \
        float(jnp.max(jnp.abs(out - ref)))
    print("KERNEL_OK")
</pallas_src>

<mosaic_0001>
module attributes {stable_mosaic.version = 11 : i64} {
  func.func @_ffn_resident_kernel(%arg0: i32, %arg1: memref<16x128xbf16, #tpu.memory_space<vmem>>, %arg2: memref<128x256xbf16, #tpu.memory_space<vmem>>, %arg3: memref<1x256xf32, #tpu.memory_space<vmem>>, %arg4: memref<256x128xbf16, #tpu.memory_space<vmem>>, %arg5: memref<1x128xf32, #tpu.memory_space<vmem>>, %arg6: memref<16x128xf32, #tpu.memory_space<vmem>>) attributes {dimension_semantics = [#tpu.dimension_semantics<parallel>], iteration_bounds = array<i64: 1>, scalar_prefetch = 0 : i64, scratch_operands = 0 : i64, tpu.core_type = #tpu.core_type<tc>, window_params = [{transform_indices = @transform_0, window_bounds = array<i64: 16, 128>}, {pipeline_mode = #tpu.pipeline_mode<synchronous>, transform_indices = @transform_1, window_bounds = array<i64: 128, 256>}, {pipeline_mode = #tpu.pipeline_mode<synchronous>, transform_indices = @transform_2, window_bounds = array<i64: 1, 256>}, {pipeline_mode = #tpu.pipeline_mode<synchronous>, transform_indices = @transform_3, window_bounds = array<i64: 256, 128>}, {pipeline_mode = #tpu.pipeline_mode<synchronous>, transform_indices = @transform_4, window_bounds = array<i64: 1, 128>}, {transform_indices = @transform_5, window_bounds = array<i64: 16, 128>}]} {
    %c0 = arith.constant 0 : index
    %c0_0 = arith.constant 0 : index
    %0 = vector.load %arg1[%c0, %c0_0] : memref<16x128xbf16, #tpu.memory_space<vmem>>, vector<16x128xbf16>
    %c0_1 = arith.constant 0 : index
    %c0_2 = arith.constant 0 : index
    %1 = vector.load %arg2[%c0_1, %c0_2] : memref<128x256xbf16, #tpu.memory_space<vmem>>, vector<128x256xbf16>
    %cst = arith.constant dense<0.000000e+00> : vector<16x256xf32>
    %2 = tpu.matmul %0, %1, %cst {dimension_numbers = #tpu.dot_dimension_numbers<[1], [0], [0], [1], [0, 0, 1, 1], [], []>} : vector<16x128xbf16>, vector<128x256xbf16>, vector<16x256xf32> -> vector<16x256xf32>
    %c0_3 = arith.constant 0 : index
    %c0_4 = arith.constant 0 : index
    %3 = vector.load %arg3[%c0_3, %c0_4] : memref<1x256xf32, #tpu.memory_space<vmem>>, vector<1x256xf32>
    %4 = vector.broadcast %3 : vector<1x256xf32> to vector<16x256xf32>
    %5 = arith.addf %2, %4 : vector<16x256xf32>
    %cst_5 = arith.constant 0.000000e+00 : f32
    %6 = vector.broadcast %cst_5 : f32 to vector<16x256xf32>
    %7 = arith.maximumf %5, %6 : vector<16x256xf32>
    %8 = arith.truncf %7 : vector<16x256xf32> to vector<16x256xbf16>
    %c0_6 = arith.constant 0 : index
    %c0_7 = arith.constant 0 : index
    %9 = vector.load %arg4[%c0_6, %c0_7] : memref<256x128xbf16, #tpu.memory_space<vmem>>, vector<256x128xbf16>
    %cst_8 = arith.constant dense<0.000000e+00> : vector<16x128xf32>
    %10 = tpu.matmul %8, %9, %cst_8 {dimension_numbers = #tpu.dot_dimension_numbers<[1], [0], [0], [1], [0, 0, 1, 1], [], []>} : vector<16x256xbf16>, vector<256x128xbf16>, vector<16x128xf32> -> vector<16x128xf32>
    %c0_9 = arith.constant 0 : index
    %c0_10 = arith.constant 0 : index
    %11 = vector.load %arg5[%c0_9, %c0_10] : memref<1x128xf32, #tpu.memory_space<vmem>>, vector<1x128xf32>
    %12 = vector.broadcast %11 : vector<1x128xf32> to vector<16x128xf32>
    %13 = arith.addf %10, %12 : vector<16x128xf32>
    %c0_11 = arith.constant 0 : index
    %c0_12 = arith.constant 0 : index
    %14 = vector.load %arg6[%c0_11, %c0_12] : memref<16x128xf32, #tpu.memory_space<vmem>>, vector<16x128xf32>
    tpu.vector_store %arg6[%c0_11, %c0_12], %13 {strides = array<i32>} : memref<16x128xf32, #tpu.memory_space<vmem>>, vector<16x128xf32>,
    return
  }
  func.func @transform_0(%arg0: i32) -> (i32, i32) {
    %c0_i32 = arith.constant 0 : i32
    %c0_i32_0 = arith.constant 0 : i32
    return %arg0, %c0_i32 : i32, i32
  }
  func.func @transform_1(%arg0: i32) -> (i32, i32) {
    %c0_i32 = arith.constant 0 : i32
    %c0_i32_0 = arith.constant 0 : i32
    %c0_i32_1 = arith.constant 0 : i32
    return %c0_i32, %c0_i32_0 : i32, i32
  }
  func.func @transform_2(%arg0: i32) -> (i32, i32) {
    %c0_i32 = arith.constant 0 : i32
    %c0_i32_0 = arith.constant 0 : i32
    %c0_i32_1 = arith.constant 0 : i32
    return %c0_i32, %c0_i32_0 : i32, i32
  }
  func.func @transform_3(%arg0: i32) -> (i32, i32) {
    %c0_i32 = arith.constant 0 : i32
    %c0_i32_0 = arith.constant 0 : i32
    %c0_i32_1 = arith.constant 0 : i32
    return %c0_i32, %c0_i32_0 : i32, i32
  }
  func.func @transform_4(%arg0: i32) -> (i32, i32) {
    %c0_i32 = arith.constant 0 : i32
    %c0_i32_0 = arith.constant 0 : i32
    %c0_i32_1 = arith.constant 0 : i32
    return %c0_i32, %c0_i32_0 : i32, i32
  }
  func.func @transform_5(%arg0: i32) -> (i32, i32) {
    %c0_i32 = arith.constant 0 : i32
    %c0_i32_0 = arith.constant 0 : i32
    return %arg0, %c0_i32 : i32, i32
  }
}

module attributes {stable_mosaic.version = 11 : i64} {
  func.func @_ffn_resident_kernel(%arg0: i32, %arg1: memref<16x128xbf16, #tpu.memory_space<vmem>>, %arg2: memref<128x256xbf16, #tpu.memory_space<vmem>>, %arg3: memref<1x256xf32, #tpu.memory_space<vmem>>, %arg4: memref<256x128xbf16, #tpu.memory_space<vmem>>, %arg5: memref<1x128xf32, #tpu.memory_space<vmem>>, %arg6: memref<16x128xf32, #tpu.memory_space<vmem>>) attributes {dimension_semantics = [#tpu.dimension_semantics<parallel>], iteration_bounds = array<i64: 1>, scalar_prefetch = 0 : i64, scratch_operands = 0 : i64, tpu.core_type = #tpu.core_type<tc>, window_params = [{transform_indices = @transform_0, window_bounds = array<i64: 16, 128>}, {pipeline_mode = #tpu.pipeline_mode<synchronous>, transform_indices = @transform_1, window_bounds = array<i64: 128, 256>}, {pipeline_mode = #tpu.pipeline_mode<synchronous>, transform_indices = @transform_2, window_bounds = array<i64: 1, 256>}, {pipeline_mode = #tpu.pipeline_mode<synchronous>, transform_indices = @transform_3, window_bounds = array<i64: 256, 128>}, {pipeline_mode = #tpu.pipeline_mode<synchronous>, transform_indices = @transform_4, window_bounds = array<i64: 1, 128>}, {transform_indices = @transform_5, window_bounds = array<i64: 16, 128>}]} {
    %c0 = arith.constant 0 : index
    %c0_0 = arith.constant 0 : index
    %0 = vector.load %arg1[%c0, %c0_0] : memref<16x128xbf16, #tpu.memory_space<vmem>>, vector<16x128xbf16>
    %c0_1 = arith.constant 0 : index
    %c0_2 = arith.constant 0 : index
    %1 = vector.load %arg2[%c0_1, %c0_2] : memref<128x256xbf16, #tpu.memory_space<vmem>>, vector<128x256xbf16>
    %cst = arith.constant dense<0.000000e+00> : vector<16x256xf32>
    %2 = tpu.matmul %0, %1, %cst {dimension_numbers = #tpu.dot_dimension_numbers<[1], [0], [0], [1], [0, 0, 1, 1], [], []>} : vector<16x128xbf16>, vector<128x256xbf16>, vector<16x256xf32> -> vector<16x256xf32>
    %c0_3 = arith.constant 0 : index
    %c0_4 = arith.constant 0 : index
    %3 = vector.load %arg3[%c0_3, %c0_4] : memref<1x256xf32, #tpu.memory_space<vmem>>, vector<1x256xf32>
    %4 = vector.broadcast %3 : vector<1x256xf32> to vector<16x256xf32>
    %5 = arith.addf %2, %4 : vector<16x256xf32>
    %cst_5 = arith.constant 0.000000e+00 : f32
    %6 = vector.broadcast %cst_5 : f32 to vector<16x256xf32>
    %7 = arith.maximumf %5, %6 : vector<16x256xf32>
    %8 = arith.truncf %7 : vector<16x256xf32> to vector<16x256xbf16>
    %c0_6 = arith.constant 0 : index
    %c0_7 = arith.constant 0 : index
    %9 = vector.load %arg4[%c0_6, %c0_7] : memref<256x128xbf16, #tpu.memory_space<vmem>>, vector<256x128xbf16>
    %cst_8 = arith.constant dense<0.000000e+00> : vector<16x128xf32>
    %10 = tpu.matmul %8, %9, %cst_8 {dimension_numbers = #tpu.dot_dimension_numbers<[1], [0], [0], [1], [0, 0, 1, 1], [], []>} : vector<16x256xbf16>, vector<256x128xbf16>, vector<16x128xf32> -> vector<16x128xf32>
    %c0_9 = arith.constant 0 : index
    %c0_10 = arith.constant 0 : index
    %11 = vector.load %arg5[%c0_9, %c0_10] : memref<1x128xf32, #tpu.memory_space<vmem>>, vector<1x128xf32>
    %12 = vector.broadcast %11 : vector<1x128xf32> to vector<16x128xf32>
    %13 = arith.addf %10, %12 : vector<16x128xf32>
    %c0_11 = arith.constant 0 : index
    %c0_12 = arith.constant 0 : index
    %14 = vector.load %arg6[%c0_11, %c0_12] : memref<16x128xf32, #tpu.memory_space<vmem>>, vector<16x128xf32>
    tpu.vector_store %arg6[%c0_11, %c0_12], %13 {strides = array<i32>} : memref<16x128xf32, #tpu.memory_space<vmem>>, vector<16x128xf32>,
    return
  }
  func.func @transform_0(%arg0: i32) -> (i32, i32) {
    %c0_i32 = arith.constant 0 : i32
    %c0_i32_0 = arith.constant 0 : i32
    return %arg0, %c0_i32 : i32, i32
  }
  func.func @transform_1(%arg0: i32) -> (i32, i32) {
    %c0_i32 = arith.constant 0 : i32
    %c0_i32_0 = arith.constant 0 : i32
    %c0_i32_1 = arith.constant 0 : i32
    return %c0_i32, %c0_i32_0 : i32, i32
  }
  func.func @transform_2(%arg0: i32) -> (i32, i32) {
    %c0_i32 = arith.constant 0 : i32
    %c0_i32_0 = arith.constant 0 : i32
    %c0_i32_1 = arith.constant 0 : i32
    return %c0_i32, %c0_i32_0 : i32, i32
  }
  func.func @transform_3(%arg0: i32) -> (i32, i32) {
    %c0_i32 = arith.constant 0 : i32
    %c0_i32_0 = arith.constant 0 : i32
    %c0_i32_1 = arith.constant 0 : i32
    return %c0_i32, %c0_i32_0 : i32, i32
  }
  func.func @transform_4(%arg0: i32) -> (i32, i32) {
    %c0_i32 = arith.constant 0 : i32
    %c0_i32_0 = arith.constant 0 : i32
    %c0_i32_1 = arith.constant 0 : i32
    return %c0_i32, %c0_i32_0 : i32, i32
  }
  func.func @transform_5(%arg0: i32) -> (i32, i32) {
    %c0_i32 = arith.constant 0 : i32
    %c0_i32_0 = arith.constant 0 : i32
    return %arg0, %c0_i32 : i32, i32
  }
}

</mosaic_0001>

<llo_original>
// kernel: tpu_custom_call.1
$region0: #{tpu_custom_call.1}
  #allocation0 [shape = 'u32[]', space=smem, size = 0x4, offset = 0x4, fixed_abs, tag = 'smem constant byte address 0x4 - core index']
  #allocation1 [shape = 'u32[72,128]{1,0:T(1,128)}', space=vmem, size = 0x9000, scoped, tag = 'internal scratch']
  %s0 = inlined_call_operand.hbm [shape: bf16[16,128], index: 0, kind: input, shape index: {}]
  %s1 = inlined_call_operand.hbm [shape: bf16[128,256], index: 1, kind: input, shape index: {}]
  %s2 = inlined_call_operand.hbm [shape: f32[1,256], index: 2, kind: input, shape index: {}]
  %s3 = inlined_call_operand.hbm [shape: bf16[256,128], index: 3, kind: input, shape index: {}]
  %s4 = inlined_call_operand.vmem [shape: f32[1,128], index: 4, kind: input, shape index: {}]
  %s5 = inlined_call_operand.hbm [shape: f32[16,128], index: 5, kind: output, shape index: {}]
  %s6 = sld [smem:[#allocation0]]
  $region46: #{tpu_custom_call.1} parent=0
    _
  %s8 = ssub.s32 1, %s6
  %s9 = scalar_select 0, %s8, %s6
  $region1: #{tpu_custom_call.1} parent=0
    #allocation2 [shape = 'u8[4096]{0}', space=vmem, size = 0x1000, scoped, tag = 'input window, operand 0, single buffered']
    #allocation3 [shape = 's32[1]{0}', space=sflag, size = 0x4, scoped, tag = 'scoped memory for tpu_custom_call.1']
    #allocation4 [shape = 's32[1]{0}', space=sflag, size = 0x4, scoped, tag = 'scoped memory for tpu_custom_call.1']
    #allocation5 [shape = 'u8[65536]{0}', space=vmem, size = 0x10000, scoped, tag = 'input window, operand 1, single buffered']
    #allocation6 [shape = 's32[1]{0}', space=sflag, size = 0x4, scoped, tag = 'scoped memory for tpu_custom_call.1']
    #allocation7 [shape = 'u8[1024]{0}', space=vmem, size = 0x400, scoped, tag = 'input window, operand 2, single buffered']
    #allocation8 [shape = 'u8[65536]{0}', space=vmem, size = 0x10000, scoped, tag = 'input window, operand 3, single buffered']
    #allocation9 [shape = 's32[1]{0}', space=sflag, size = 0x4, scoped, tag = 'scoped memory for tpu_custom_call.1']
    #allocation10 [shape = 'u8[8192]{0}', space=vmem, size = 0x2000, scoped, tag = 'output window, operand 0, single buffered']
    %10 = vsyncpa [#allocation3], 0
    %11 = vsyncpa [#allocation6], 0
    %12 = vsyncpa [#allocation9], 0
    %13 = vsyncpa [#allocation4], 0
    // Predicated region
    $region2: #{tpu_custom_call.1} parent=1 // pred_check
      _
    $region3: #{tpu_custom_call.1} parent=1 // pred_check_branch
      %15 = sbr.rel (0) target = $region5
    $region4: #{tpu_custom_call.1} parent=1 // pred_region
      %17 = vsyncadd [#allocation3], 0
      %s18 = sshll.u32 %s0, 4
      %s19 = int_to_ptr.hbm [resolvable:$true] %s18
      %s20 = sshll.u32 [#allocation2], 4
      %s21 = int_to_ptr.vmem [resolvable:$true] %s20
      %26 = dma.hbm_to_vmem [thread:$0]  %s19, 128, %s21, [#allocation3], 64, 64, 4
    $region5: #{tpu_custom_call.1} parent=1 // pred_fallthru
      _
    // Predicated region
    $region6: #{tpu_custom_call.1} parent=1 // pred_check
      _
    $region7: #{tpu_custom_call.1} parent=1 // pred_check_branch
      %28 = sbr.rel (0) target = $region9
    $region8: #{tpu_custom_call.1} parent=1 // pred_region
      %30 = vsyncadd [#allocation6], 0
      %s31 = sshll.u32 %s1, 4
      %s32 = int_to_ptr.hbm [resolvable:$true] %s31
      %s33 = sshll.u32 [#allocation5], 4
      %s34 = int_to_ptr.vmem [resolvable:$true] %s33
      %39 = dma.hbm_to_vmem [thread:$0]  %s32, 2048, %s34, [#allocation6], 128, 128, 8
    $region9: #{tpu_custom_call.1} parent=1 // pred_fallthru
      _
    // Predicated region
    $region10: #{tpu_custom_call.1} parent=1 // pred_check
      _
    $region11: #{tpu_custom_call.1} parent=1 // pred_check_branch
      %41 = sbr.rel (0) target = $region13
    $region12: #{tpu_custom_call.1} parent=1 // pred_region
      %43 = vsyncadd [#allocation6], 0
      %s45 = sshll.u32 %s2, 4
      %s46 = int_to_ptr.hbm [resolvable:$true] %s45
      %s47 = sshll.u32 [#allocation7], 4
      %s48 = int_to_ptr.vmem [resolvable:$true] %s47
      %50 = dma.hbm_to_vmem [thread:$0]  %s46, 32, %s48, [#allocation6]
    $region13: #{tpu_custom_call.1} parent=1 // pred_fallthru
      _
    // Predicated region
    $region14: #{tpu_custom_call.1} parent=1 // pred_check
      _
    $region15: #{tpu_custom_call.1} parent=1 // pred_check_branch
      %52 = sbr.rel (0) target = $region17
    $region16: #{tpu_custom_call.1} parent=1 // pred_region
      %54 = vsyncadd [#allocation9], 0
      %s55 = sshll.u32 %s3, 4
      %s56 = int_to_ptr.hbm [resolvable:$true] %s55
      %s57 = sshll.u32 [#allocation8], 4
      %s58 = int_to_ptr.vmem [resolvable:$true] %s57
      %63 = dma.hbm_to_vmem [thread:$0]  %s56, 2048, %s58, [#allocation9], 64, 64, 4
    $region17: #{tpu_custom_call.1} parent=1 // pred_fallthru
      _
    // Predicated region
    $region18: #{tpu_custom_call.1} parent=1 // pred_check
      _
    $region19: #{tpu_custom_call.1} parent=1 // pred_check_branch
      %65 = sbr.rel (0) target = $region21
    $region20: #{tpu_custom_call.1} parent=1 // pred_region
      _
    $region21: #{tpu_custom_call.1} parent=1 // pred_fallthru
      _
    // Predicated region
    $region22: #{tpu_custom_call.1} parent=1 // pred_check
      _
    $region23: #{tpu_custom_call.1} parent=1 // pred_check_branch
      %67 = sbr.rel (0) target = $region25
    $region24: #{tpu_custom_call.1} parent=1 // pred_region
      %69 = dma.done [#allocation3], 128
    $region25: #{tpu_custom_call.1} parent=1 // pred_fallthru
      _
    // Predicated region
    $region26: #{tpu_custom_call.1} parent=1 // pred_check
      _
    $region27: #{tpu_custom_call.1} parent=1 // pred_check_branch
      %71 = sbr.rel (0) target = $region29
    $region28: #{tpu_custom_call.1} parent=1 // pred_region
      %73 = dma.done [#allocation6], 2048
    $region29: #{tpu_custom_call.1} parent=1 // pred_fallthru
      _
    // Predicated region
    $region30: #{tpu_custom_call.1} parent=1 // pred_check
      _
    $region31: #{tpu_custom_call.1} parent=1 // pred_check_branch
      %75 = sbr.rel (0) target = $region33
    $region32: #{tpu_custom_call.1} parent=1 // pred_region
      %77 = dma.done [#allocation6], 32
    $region33: #{tpu_custom_call.1} parent=1 // pred_fallthru
      _
    // Predicated region
    $region34: #{tpu_custom_call.1} parent=1 // pred_check
      _
    $region35: #{tpu_custom_call.1} parent=1 // pred_check_branch
      %79 = sbr.rel (0) target = $region37
    $region36: #{tpu_custom_call.1} parent=1 // pred_region
      %81 = dma.done [#allocation9], 2048
    $region37: #{tpu_custom_call.1} parent=1 // pred_fallthru
      _
    %v82 = vld [vmem:[#allocation2] sm:$0xf]
    %v83 = vld [vmem:[#allocation2 + $0x4] sm:$0xf]
    %v84 = vld [vmem:[#allocation5] sm:$0xff]
    %v85 = vld [vmem:[#allocation5 + $0x8] sm:$0xff]
    %v86 = vld [vmem:[#allocation5 + $0x10] sm:$0xff]
    %v87 = vld [vmem:[#allocation5 + $0x18] sm:$0xff]
    %v88 = vld [vmem:[#allocation5 + $0x20] sm:$0xff]
    %v89 = vld [vmem:[#allocation5 + $0x28] sm:$0xff]
    %v90 = vld [vmem:[#allocation5 + $0x30] sm:$0xff]
    %v91 = vld [vmem:[#allocation5 + $0x38] sm:$0xff]
    %v92 = vld [vmem:[#allocation5 + $0x40] sm:$0xff]
    %v93 = vld [vmem:[#allocation5 + $0x48] sm:$0xff]
    %v94 = vld [vmem:[#allocation5 + $0x50] sm:$0xff]
    %v95 = vld [vmem:[#allocation5 + $0x58] sm:$0xff]
    %v96 = vld [vmem:[#allocation5 + $0x60] sm:$0xff]
    %v97 = vld [vmem:[#allocation5 + $0x68] sm:$0xff]
    %v98 = vld [vmem:[#allocation5 + $0x70] sm:$0xff]
    %v99 = vld [vmem:[#allocation5 + $0x78] sm:$0xff]
    %v100 = vld [vmem:[#allocation7] sm:$0x3]
    %v102 = vperm.slane %v100, 0
    %v103 = vperm.slane %v100, 1
    %v108 = vunpack.c.l.b16 %v82
    %v109 = vunpack.c.l.b16 %v83
    %v110 = vpack.c.b16 %v109, %v108
    %v128 = vunpack.c.l.b16 %v84
    %v129 = vunpack.c.h.b16 %v84
    %v130 = vunpack.c.l.b16 %v85
    %v131 = vunpack.c.h.b16 %v85
    %v132 = vunpack.c.l.b16 %v86
    %v133 = vunpack.c.h.b16 %v86
    %v134 = vunpack.c.l.b16 %v87
    %v135 = vunpack.c.h.b16 %v87
    %v136 = vunpack.c.l.b16 %v88
    %v137 = vunpack.c.h.b16 %v88
    %v138 = vunpack.c.l.b16 %v89
    %v139 = vunpack.c.h.b16 %v89
    %v140 = vunpack.c.l.b16 %v90
    %v141 = vunpack.c.h.b16 %v90
    %v142 = vunpack.c.l.b16 %v91
    %v143 = vunpack.c.h.b16 %v91
    %v144 = vunpack.c.l.b16 %v92
    %v145 = vunpack.c.h.b16 %v92
    %v146 = vunpack.c.l.b16 %v93
    %v147 = vunpack.c.h.b16 %v93
    %v148 = vunpack.c.l.b16 %v94
    %v149 = vunpack.c.h.b16 %v94
    %v150 = vunpack.c.l.b16 %v95
    %v151 = vunpack.c.h.b16 %v95
    %v152 = vunpack.c.l.b16 %v96
    %v153 = vunpack.c.h.b16 %v96
    %v154 = vunpack.c.l.b16 %v97
    %v155 = vunpack.c.h.b16 %v97
    %v156 = vunpack.c.l.b16 %v98
    %v157 = vunpack.c.h.b16 %v98
    %v158 = vunpack.c.l.b16 %v99
    %v159 = vunpack.c.h.b16 %v99
    %v160 = vpack.c.b16 %v130, %v128
    %v161 = vpack.c.b16 %v131, %v129
    %v162 = vpack.c.b16 %v134, %v132
    %v163 = vpack.c.b16 %v135, %v133
    %v164 = vpack.c.b16 %v138, %v136
    %v165 = vpack.c.b16 %v139, %v137
    %v166 = vpack.c.b16 %v142, %v140
    %v167 = vpack.c.b16 %v143, %v141
    %v168 = vpack.c.b16 %v146, %v144
    %v169 = vpack.c.b16 %v147, %v145
    %v170 = vpack.c.b16 %v150, %v148
    %v171 = vpack.c.b16 %v151, %v149
    %v172 = vpack.c.b16 %v154, %v152
    %v173 = vpack.c.b16 %v155, %v153
    %v174 = vpack.c.b16 %v158, %v156
    %v175 = vpack.c.b16 %v159, %v157
    %192 = vmatpush.bf16.msra.mxu0 %v174
    %193 = vmatpush.bf16.msra.mxu0 %v172
    %194 = vmatpush.bf16.msra.mxu0 %v170
    %195 = vmatpush.bf16.msra.mxu0 %v168
    %196 = vmatpush.bf16.msra.mxu0 %v166
    %197 = vmatpush.bf16.msra.mxu0 %v164
    %198 = vmatpush.bf16.msra.mxu0 %v162
    %199 = vmatpush.bf16.msra.mxu0 %v160
    %200 = vmatmul.bf16.gmra.mxu0 %v110
    %v201 = vpop.f32.mrf.mxu0
    %v202 = vadd.f32 %v102, %v201
    %v203 = vpop.f32.mrf.mxu0
    %v204 = vadd.f32 %v102, %v203
    %205 = vdwg.mxu0
    %206 = vmatpush.bf16.msra.mxu0 %v175
    %207 = vmatpush.bf16.msra.mxu0 %v173
    %208 = vmatpush.bf16.msra.mxu0 %v171
    %209 = vmatpush.bf16.msra.mxu0 %v169
    %210 = vmatpush.bf16.msra.mxu0 %v167
    %211 = vmatpush.bf16.msra.mxu0 %v165
    %212 = vmatpush.bf16.msra.mxu0 %v163
    %213 = vmatpush.bf16.msra.mxu0 %v161
    %214 = vmatmul.bf16.gmra.mxu0 %v110
    %v215 = vpop.f32.mrf.mxu0
    %v216 = vadd.f32 %v103, %v215
    %v217 = vpop.f32.mrf.mxu0
    %v218 = vadd.f32 %v103, %v217
    %219 = vdwg.mxu0
    %v220 = vmax.f32 %v202, 0.0
    %v221 = vmax.f32 %v216, 0.0
    %v222 = vmax.f32 %v204, 0.0
    %v223 = vmax.f32 %v218, 0.0
    %v224 = vpack.c.bf16 %v222, %v220
    %v225 = vpack.c.bf16 %v223, %v221
    %v226 = vld [vmem:[#allocation8] sm:$0xf]
    %v227 = vld [vmem:[#allocation8 + $0x4] sm:$0xf]
    %v228 = vld [vmem:[#allocation8 + $0x8] sm:$0xf]
    %v229 = vld [vmem:[#allocation8 + $0xc] sm:$0xf]
    %v230 = vld [vmem:[#allocation8 + $0x10] sm:$0xf]
    %v231 = vld [vmem:[#allocation8 + $0x14] sm:$0xf]
    %v232 = vld [vmem:[#allocation8 + $0x18] sm:$0xf]
    %v233 = vld [vmem:[#allocation8 + $0x1c] sm:$0xf]
    %v234 = vld [vmem:[#allocation8 + $0x20] sm:$0xf]
    %v235 = vld [vmem:[#allocation8 + $0x24] sm:$0xf]
    %v236 = vld [vmem:[#allocation8 + $0x28] sm:$0xf]
    %v237 = vld [vmem:[#allocation8 + $0x2c] sm:$0xf]
    %v238 = vld [vmem:[#allocation8 + $0x30] sm:$0xf]
    %v239 = vld [vmem:[#allocation8 + $0x34] sm:$0xf]
    %v240 = vld [vmem:[#allocation8 + $0x38] sm:$0xf]
    %v241 = vld [vmem:[#allocation8 + $0x3c] sm:$0xf]
    %v242 = vld [vmem:[#allocation8 + $0x40] sm:$0xf]
    %v243 = vld [vmem:[#allocation8 + $0x44] sm:$0xf]
    %v244 = vld [vmem:[#allocation8 + $0x48] sm:$0xf]
    %v245 = vld [vmem:[#allocation8 + $0x4c] sm:$0xf]
    %v246 = vld [vmem:[#allocation8 + $0x50] sm:$0xf]
    %v247 = vld [vmem:[#allocation8 + $0x54] sm:$0xf]
    %v248 = vld [vmem:[#allocation8 + $0x58] sm:$0xf]
    %v249 = vld [vmem:[#allocation8 + $0x5c] sm:$0xf]
    %v250 = vld [vmem:[#allocation8 + $0x60] sm:$0xf]
    %v251 = vld [vmem:[#allocation8 + $0x64] sm:$0xf]
    %v252 = vld [vmem:[#allocation8 + $0x68] sm:$0xf]
    %v253 = vld [vmem:[#allocation8 + $0x6c] sm:$0xf]
    %v254 = vld [vmem:[#allocation8 + $0x70] sm:$0xf]
    %v255 = vld [vmem:[#allocation8 + $0x74] sm:$0xf]
    %v256 = vld [vmem:[#allocation8 + $0x78] sm:$0xf]
    %v257 = vld [vmem:[#allocation8 + $0x7c] sm:$0xf]
    %v258 = vld [vmem:[%s4] sm:$0x1]
    %v260 = vperm.slane %v258, 0
    %v294 = vunpack.c.l.b16 %v226
    %v295 = vunpack.c.l.b16 %v227
    %v296 = vunpack.c.l.b16 %v228
    %v297 = vunpack.c.l.b16 %v229
    %v298 = vunpack.c.l.b16 %v230
    %v299 = vunpack.c.l.b16 %v231
    %v300 = vunpack.c.l.b16 %v232
    %v301 = vunpack.c.l.b16 %v233
    %v302 = vunpack.c.l.b16 %v234
    %v303 = vunpack.c.l.b16 %v235
    %v304 = vunpack.c.l.b16 %v236
    %v305 = vunpack.c.l.b16 %v237
    %v306 = vunpack.c.l.b16 %v238
    %v307 = vunpack.c.l.b16 %v239
    %v308 = vunpack.c.l.b16 %v240
    %v309 = vunpack.c.l.b16 %v241
    %v310 = vunpack.c.l.b16 %v242
    %v311 = vunpack.c.l.b16 %v243
    %v312 = vunpack.c.l.b16 %v244
    %v313 = vunpack.c.l.b16 %v245
    %v314 = vunpack.c.l.b16 %v246
    %v315 = vunpack.c.l.b16 %v247
    %v316 = vunpack.c.l.b16 %v248
    %v317 = vunpack.c.l.b16 %v249
    %v318 = vunpack.c.l.b16 %v250
    %v319 = vunpack.c.l.b16 %v251
    %v320 = vunpack.c.l.b16 %v252
    %v321 = vunpack.c.l.b16 %v253
    %v322 = vunpack.c.l.b16 %v254
    %v323 = vunpack.c.l.b16 %v255
    %v324 = vunpack.c.l.b16 %v256
    %v325 = vunpack.c.l.b16 %v257
    %v326 = vpack.c.b16 %v295, %v294
    %v327 = vpack.c.b16 %v297, %v296
    %v328 = vpack.c.b16 %v299, %v298
    %v329 = vpack.c.b16 %v301, %v300
    %v330 = vpack.c.b16 %v303, %v302
    %v331 = vpack.c.b16 %v305, %v304
    %v332 = vpack.c.b16 %v307, %v306
    %v333 = vpack.c.b16 %v309, %v308
    %v334 = vpack.c.b16 %v311, %v310
    %v335 = vpack.c.b16 %v313, %v312
    %v336 = vpack.c.b16 %v315, %v314
    %v337 = vpack.c.b16 %v317, %v316
    %v338 = vpack.c.b16 %v319, %v318
    %v339 = vpack.c.b16 %v321, %v320
    %v340 = vpack.c.b16 %v323, %v322
    %v341 = vpack.c.b16 %v325, %v324
    %358 = vmatpush.bf16.msra.mxu0 %v333
    %359 = vmatpush.bf16.msra.mxu0 %v332
    %360 = vmatpush.bf16.msra.mxu0 %v331
    %361 = vmatpush.bf16.msra.mxu0 %v330
    %362 = vmatpush.bf16.msra.mxu0 %v329
    %363 = vmatpush.bf16.msra.mxu0 %v328
    %364 = vmatpush.bf16.msra.mxu0 %v327
    %365 = vmatpush.bf16.msra.mxu0 %v326
    %366 = vmatmul.bf16.gmra.mxu0 %v224
    %v367 = vpop.f32.mrf.mxu0
    %v368 = vadd.f32 %v260, %v367
    %v369 = vpop.f32.mrf.mxu0
    %v370 = vadd.f32 %v260, %v369
    %371 = vdwg.mxu0
    %372 = vmatpush.bf16.msra.mxu0 %v341
    %373 = vmatpush.bf16.msra.mxu0 %v340
    %374 = vmatpush.bf16.msra.mxu0 %v339
    %375 = vmatpush.bf16.msra.mxu0 %v338
    %376 = vmatpush.bf16.msra.mxu0 %v337
    %377 = vmatpush.bf16.msra.mxu0 %v336
    %378 = vmatpush.bf16.msra.mxu0 %v335
    %379 = vmatpush.bf16.msra.mxu0 %v334
    %380 = vmatmul.bf16.gmra.mxu0 %v225
    %v381 = vpop.f32.mrf.mxu0
    %v382 = vadd.f32 %v368, %v381
    %v383 = vpop.f32.mrf.mxu0
    %v384 = vadd.f32 %v370, %v383
    %385 = vdwg.mxu0
    %386 = vst [vmem:[#allocation10] sm:$0xff] %v382
    %387 = vst [vmem:[#allocation10 + $0x8] sm:$0xff] %v384
    // Predicated region
    $region38: #{tpu_custom_call.1} parent=1 // pred_check
      _
    $region39: #{tpu_custom_call.1} parent=1 // pred_check_branch
      %389 = sbr.rel (0) target = $region41
    $region40: #{tpu_custom_call.1} parent=1 // pred_region
      %391 = vsyncadd [#allocation4], 0
      %s392 = sshll.u32 [#allocation10], 4
      %s393 = int_to_ptr.vmem [resolvable:$true] %s392
      %s394 = sshll.u32 %s5, 4
      %s395 = int_to_ptr.hbm [resolvable:$true] %s394
      %400 = dma.vmem_to_hbm [thread:$0]  %s393, 256, %s395, [#allocation4], 128, 128, 8
    $region41: #{tpu_custom_call.1} parent=1 // pred_fallthru
      _
    // Predicated region
    $region42: #{tpu_custom_call.1} parent=1 // pred_check
      _
    $region43: #{tpu_custom_call.1} parent=1 // pred_check_branch
      %402 = sbr.rel (0) target = $region45
    $region44: #{tpu_custom_call.1} parent=1 // pred_region
      %404 = dma.done [#allocation4], 256
    $region45: #{tpu_custom_call.1} parent=1 // pred_fallthru
      _
    %405 = vsyncpa [#allocation3], 1
    %406 = vsyncpa [#allocation6], 1
    %407 = vsyncpa [#allocation9], 1
    %408 = vsyncpa [#allocation4], 1

// kernel: tpu_custom_call.1
$region0: #{tpu_custom_call.1}
  #allocation0 [shape = 'u32[]', space=smem, size = 0x4, offset = 0x4, fixed_abs, tag = 'smem constant byte address 0x4 - core index']
  #allocation1 [shape = 'u32[72,128]{1,0:T(1,128)}', space=vmem, size = 0x9000, scoped, tag = 'internal scratch']
  %s0 = inlined_call_operand.hbm [shape: bf16[16,128], index: 0, kind: input, shape index: {}]
  %s1 = inlined_call_operand.hbm [shape: bf16[128,256], index: 1, kind: input, shape index: {}]
  %s2 = inlined_call_operand.hbm [shape: f32[1,256], index: 2, kind: input, shape index: {}]
  %s3 = inlined_call_operand.hbm [shape: bf16[256,128], index: 3, kind: input, shape index: {}]
  %s4 = inlined_call_operand.vmem [shape: f32[1,128], index: 4, kind: input, shape index: {}]
  %s5 = inlined_call_operand.hbm [shape: f32[16,128], index: 5, kind: output, shape index: {}]
  %s6 = sld [smem:[#allocation0]]
  $region46: #{tpu_custom_call.1} parent=0
    _
  %s8 = ssub.s32 1, %s6
  %s9 = scalar_select 0, %s8, %s6
  $region1: #{tpu_custom_call.1} parent=0
    #allocation2 [shape = 'u8[4096]{0}', space=vmem, size = 0x1000, scoped, tag = 'input window, operand 0, single buffered']
    #allocation3 [shape = 's32[1]{0}', space=sflag, size = 0x4, scoped, tag = 'scoped memory for tpu_custom_call.1']
    #allocation4 [shape = 's32[1]{0}', space=sflag, size = 0x4, scoped, tag = 'scoped memory for tpu_custom_call.1']
    #allocation5 [shape = 'u8[65536]{0}', space=vmem, size = 0x10000, scoped, tag = 'input window, operand 1, single buffered']
    #allocation6 [shape = 's32[1]{0}', space=sflag, size = 0x4, scoped, tag = 'scoped memory for tpu_custom_call.1']
    #allocation7 [shape = 'u8[1024]{0}', space=vmem, size = 0x400, scoped, tag = 'input window, operand 2, single buffered']
    #allocation8 [shape = 'u8[65536]{0}', space=vmem, size = 0x10000, scoped, tag = 'input window, operand 3, single buffered']
    #allocation9 [shape = 's32[1]{0}', space=sflag, size = 0x4, scoped, tag = 'scoped memory for tpu_custom_call.1']
    #allocation10 [shape = 'u8[8192]{0}', space=vmem, size = 0x2000, scoped, tag = 'output window, operand 0, single buffered']
    %10 = vsyncpa [#allocation3], 0
    %11 = vsyncpa [#allocation6], 0
    %12 = vsyncpa [#allocation9], 0
    %13 = vsyncpa [#allocation4], 0
    // Predicated region
    $region2: #{tpu_custom_call.1} parent=1 // pred_check
      _
    $region3: #{tpu_custom_call.1} parent=1 // pred_check_branch
      %15 = sbr.rel (0) target = $region5
    $region4: #{tpu_custom_call.1} parent=1 // pred_region
      %17 = vsyncadd [#allocation3], 0
      %s18 = sshll.u32 %s0, 4
      %s19 = int_to_ptr.hbm [resolvable:$true] %s18
      %s20 = sshll.u32 [#allocation2], 4
      %s21 = int_to_ptr.vmem [resolvable:$true] %s20
      %26 = dma.hbm_to_vmem [thread:$0]  %s19, 128, %s21, [#allocation3], 64, 64, 4
    $region5: #{tpu_custom_call.1} parent=1 // pred_fallthru
      _
    // Predicated region
    $region6: #{tpu_custom_call.1} parent=1 // pred_check
      _
    $region7: #{tpu_custom_call.1} parent=1 // pred_check_branch
      %28 = sbr.rel (0) target = $region9
    $region8: #{tpu_custom_call.1} parent=1 // pred_region
      %30 = vsyncadd [#allocation6], 0
      %s31 = sshll.u32 %s1, 4
      %s32 = int_to_ptr.hbm [resolvable:$true] %s31
      %s33 = sshll.u32 [#allocation5], 4
      %s34 = int_to_ptr.vmem [resolvable:$true] %s33
      %39 = dma.hbm_to_vmem [thread:$0]  %s32, 2048, %s34, [#allocation6], 128, 128, 8
    $region9: #{tpu_custom_call.1} parent=1 // pred_fallthru
      _
    // Predicated region
    $region10: #{tpu_custom_call.1} parent=1 // pred_check
      _
    $region11: #{tpu_custom_call.1} parent=1 // pred_check_branch
      %41 = sbr.rel (0) target = $region13
    $region12: #{tpu_custom_call.1} parent=1 // pred_region
      %43 = vsyncadd [#allocation6], 0
      %s45 = sshll.u32 %s2, 4
      %s46 = int_to_ptr.hbm [resolvable:$true] %s45
      %s47 = sshll.u32 [#allocation7], 4
      %s48 = int_to_ptr.vmem [resolvable:$true] %s47
      %50 = dma.hbm_to_vmem [thread:$0]  %s46, 32, %s48, [#allocation6]
    $region13: #{tpu_custom_call.1} parent=1 // pred_fallthru
      _
    // Predicated region
    $region14: #{tpu_custom_call.1} parent=1 // pred_check
      _
    $region15: #{tpu_custom_call.1} parent=1 // pred_check_branch
      %52 = sbr.rel (0) target = $region17
    $region16: #{tpu_custom_call.1} parent=1 // pred_region
      %54 = vsyncadd [#allocation9], 0
      %s55 = sshll.u32 %s3, 4
      %s56 = int_to_ptr.hbm [resolvable:$true] %s55
      %s57 = sshll.u32 [#allocation8], 4
      %s58 = int_to_ptr.vmem [resolvable:$true] %s57
      %63 = dma.hbm_to_vmem [thread:$0]  %s56, 2048, %s58, [#allocation9], 64, 64, 4
    $region17: #{tpu_custom_call.1} parent=1 // pred_fallthru
      _
    // Predicated region
    $region18: #{tpu_custom_call.1} parent=1 // pred_check
      _
    $region19: #{tpu_custom_call.1} parent=1 // pred_check_branch
      %65 = sbr.rel (0) target = $region21
    $region20: #{tpu_custom_call.1} parent=1 // pred_region
      _
    $region21: #{tpu_custom_call.1} parent=1 // pred_fallthru
      _
    // Predicated region
    $region22: #{tpu_custom_call.1} parent=1 // pred_check
      _
    $region23: #{tpu_custom_call.1} parent=1 // pred_check_branch
      %67 = sbr.rel (0) target = $region25
    $region24: #{tpu_custom_call.1} parent=1 // pred_region
      %69 = dma.done [#allocation3], 128
    $region25: #{tpu_custom_call.1} parent=1 // pred_fallthru
      _
    // Predicated region
    $region26: #{tpu_custom_call.1} parent=1 // pred_check
      _
    $region27: #{tpu_custom_call.1} parent=1 // pred_check_branch
      %71 = sbr.rel (0) target = $region29
    $region28: #{tpu_custom_call.1} parent=1 // pred_region
      %73 = dma.done [#allocation6], 2048
    $region29: #{tpu_custom_call.1} parent=1 // pred_fallthru
      _
    // Predicated region
    $region30: #{tpu_custom_call.1} parent=1 // pred_check
      _
    $region31: #{tpu_custom_call.1} parent=1 // pred_check_branch
      %75 = sbr.rel (0) target = $region33
    $region32: #{tpu_custom_call.1} parent=1 // pred_region
      %77 = dma.done [#allocation6], 32
    $region33: #{tpu_custom_call.1} parent=1 // pred_fallthru
      _
    // Predicated region
    $region34: #{tpu_custom_call.1} parent=1 // pred_check
      _
    $region35: #{tpu_custom_call.1} parent=1 // pred_check_branch
      %79 = sbr.rel (0) target = $region37
    $region36: #{tpu_custom_call.1} parent=1 // pred_region
      %81 = dma.done [#allocation9], 2048
    $region37: #{tpu_custom_call.1} parent=1 // pred_fallthru
      _
    %v82 = vld [vmem:[#allocation2] sm:$0xf]
    %v83 = vld [vmem:[#allocation2 + $0x4] sm:$0xf]
    %v84 = vld [vmem:[#allocation5] sm:$0xff]
    %v85 = vld [vmem:[#allocation5 + $0x8] sm:$0xff]
    %v86 = vld [vmem:[#allocation5 + $0x10] sm:$0xff]
    %v87 = vld [vmem:[#allocation5 + $0x18] sm:$0xff]
    %v88 = vld [vmem:[#allocation5 + $0x20] sm:$0xff]
    %v89 = vld [vmem:[#allocation5 + $0x28] sm:$0xff]
    %v90 = vld [vmem:[#allocation5 + $0x30] sm:$0xff]
    %v91 = vld [vmem:[#allocation5 + $0x38] sm:$0xff]
    %v92 = vld [vmem:[#allocation5 + $0x40] sm:$0xff]
    %v93 = vld [vmem:[#allocation5 + $0x48] sm:$0xff]
    %v94 = vld [vmem:[#allocation5 + $0x50] sm:$0xff]
    %v95 = vld [vmem:[#allocation5 + $0x58] sm:$0xff]
    %v96 = vld [vmem:[#allocation5 + $0x60] sm:$0xff]
    %v97 = vld [vmem:[#allocation5 + $0x68] sm:$0xff]
    %v98 = vld [vmem:[#allocation5 + $0x70] sm:$0xff]
    %v99 = vld [vmem:[#allocation5 + $0x78] sm:$0xff]
    %v100 = vld [vmem:[#allocation7] sm:$0x3]
    %v102 = vperm.slane %v100, 0
    %v103 = vperm.slane %v100, 1
    %v108 = vunpack.c.l.b16 %v82
    %v109 = vunpack.c.l.b16 %v83
    %v110 = vpack.c.b16 %v109, %v108
    %v128 = vunpack.c.l.b16 %v84
    %v129 = vunpack.c.h.b16 %v84
    %v130 = vunpack.c.l.b16 %v85
    %v131 = vunpack.c.h.b16 %v85
    %v132 = vunpack.c.l.b16 %v86
    %v133 = vunpack.c.h.b16 %v86
    %v134 = vunpack.c.l.b16 %v87
    %v135 = vunpack.c.h.b16 %v87
    %v136 = vunpack.c.l.b16 %v88
    %v137 = vunpack.c.h.b16 %v88
    %v138 = vunpack.c.l.b16 %v89
    %v139 = vunpack.c.h.b16 %v89
    %v140 = vunpack.c.l.b16 %v90
    %v141 = vunpack.c.h.b16 %v90
    %v142 = vunpack.c.l.b16 %v91
    %v143 = vunpack.c.h.b16 %v91
    %v144 = vunpack.c.l.b16 %v92
    %v145 = vunpack.c.h.b16 %v92
    %v146 = vunpack.c.l.b16 %v93
    %v147 = vunpack.c.h.b16 %v93
    %v148 = vunpack.c.l.b16 %v94
    %v149 = vunpack.c.h.b16 %v94
    %v150 = vunpack.c.l.b16 %v95
    %v151 = vunpack.c.h.b16 %v95
    %v152 = vunpack.c.l.b16 %v96
    %v153 = vunpack.c.h.b16 %v96
    %v154 = vunpack.c.l.b16 %v97
    %v155 = vunpack.c.h.b16 %v97
    %v156 = vunpack.c.l.b16 %v98
    %v157 = vunpack.c.h.b16 %v98
    %v158 = vunpack.c.l.b16 %v99
    %v159 = vunpack.c.h.b16 %v99
    %v160 = vpack.c.b16 %v130, %v128
    %v161 = vpack.c.b16 %v131, %v129
    %v162 = vpack.c.b16 %v134, %v132
    %v163 = vpack.c.b16 %v135, %v133
    %v164 = vpack.c.b16 %v138, %v136
    %v165 = vpack.c.b16 %v139, %v137
    %v166 = vpack.c.b16 %v142, %v140
    %v167 = vpack.c.b16 %v143, %v141
    %v168 = vpack.c.b16 %v146, %v144
    %v169 = vpack.c.b16 %v147, %v145
    %v170 = vpack.c.b16 %v150, %v148
    %v171 = vpack.c.b16 %v151, %v149
    %v172 = vpack.c.b16 %v154, %v152
    %v173 = vpack.c.b16 %v155, %v153
    %v174 = vpack.c.b16 %v158, %v156
    %v175 = vpack.c.b16 %v159, %v157
    %192 = vmatpush.bf16.msra.mxu0 %v174
    %193 = vmatpush.bf16.msra.mxu0 %v172
    %194 = vmatpush.bf16.msra.mxu0 %v170
    %195 = vmatpush.bf16.msra.mxu0 %v168
    %196 = vmatpush.bf16.msra.mxu0 %v166
    %197 = vmatpush.bf16.msra.mxu0 %v164
    %198 = vmatpush.bf16.msra.mxu0 %v162
    %199 = vmatpush.bf16.msra.mxu0 %v160
    %200 = vmatmul.bf16.gmra.mxu0 %v110
    %v201 = vpop.f32.mrf.mxu0
    %v202 = vadd.f32 %v102, %v201
    %v203 = vpop.f32.mrf.mxu0
    %v204 = vadd.f32 %v102, %v203
    %205 = vdwg.mxu0
    %206 = vmatpush.bf16.msra.mxu0 %v175
    %207 = vmatpush.bf16.msra.mxu0 %v173
    %208 = vmatpush.bf16.msra.mxu0 %v171
    %209 = vmatpush.bf16.msra.mxu0 %v169
    %210 = vmatpush.bf16.msra.mxu0 %v167
    %211 = vmatpush.bf16.msra.mxu0 %v165
    %212 = vmatpush.bf16.msra.mxu0 %v163
    %213 = vmatpush.bf16.msra.mxu0 %v161
    %214 = vmatmul.bf16.gmra.mxu0 %v110
    %v215 = vpop.f32.mrf.mxu0
    %v216 = vadd.f32 %v103, %v215
    %v217 = vpop.f32.mrf.mxu0
    %v218 = vadd.f32 %v103, %v217
    %219 = vdwg.mxu0
    %v220 = vmax.f32 %v202, 0.0
    %v221 = vmax.f32 %v216, 0.0
    %v222 = vmax.f32 %v204, 0.0
    %v223 = vmax.f32 %v218, 0.0
    %v224 = vpack.c.bf16 %v222, %v220
    %v225 = vpack.c.bf16 %v223, %v221
    %v226 = vld [vmem:[#allocation8] sm:$0xf]
    %v227 = vld [vmem:[#allocation8 + $0x4] sm:$0xf]
    %v228 = vld [vmem:[#allocation8 + $0x8] sm:$0xf]
    %v229 = vld [vmem:[#allocation8 + $0xc] sm:$0xf]
    %v230 = vld [vmem:[#allocation8 + $0x10] sm:$0xf]
    %v231 = vld [vmem:[#allocation8 + $0x14] sm:$0xf]
    %v232 = vld [vmem:[#allocation8 + $0x18] sm:$0xf]
    %v233 = vld [vmem:[#allocation8 + $0x1c] sm:$0xf]
    %v234 = vld [vmem:[#allocation8 + $0x20] sm:$0xf]
    %v235 = vld [vmem:[#allocation8 + $0x24] sm:$0xf]
    %v236 = vld [vmem:[#allocation8 + $0x28] sm:$0xf]
    %v237 = vld [vmem:[#allocation8 + $0x2c] sm:$0xf]
    %v238 = vld [vmem:[#allocation8 + $0x30] sm:$0xf]
    %v239 = vld [vmem:[#allocation8 + $0x34] sm:$0xf]
    %v240 = vld [vmem:[#allocation8 + $0x38] sm:$0xf]
    %v241 = vld [vmem:[#allocation8 + $0x3c] sm:$0xf]
    %v242 = vld [vmem:[#allocation8 + $0x40] sm:$0xf]
    %v243 = vld [vmem:[#allocation8 + $0x44] sm:$0xf]
    %v244 = vld [vmem:[#allocation8 + $0x48] sm:$0xf]
    %v245 = vld [vmem:[#allocation8 + $0x4c] sm:$0xf]
    %v246 = vld [vmem:[#allocation8 + $0x50] sm:$0xf]
    %v247 = vld [vmem:[#allocation8 + $0x54] sm:$0xf]
    %v248 = vld [vmem:[#allocation8 + $0x58] sm:$0xf]
    %v249 = vld [vmem:[#allocation8 + $0x5c] sm:$0xf]
    %v250 = vld [vmem:[#allocation8 + $0x60] sm:$0xf]
    %v251 = vld [vmem:[#allocation8 + $0x64] sm:$0xf]
    %v252 = vld [vmem:[#allocation8 + $0x68] sm:$0xf]
    %v253 = vld [vmem:[#allocation8 + $0x6c] sm:$0xf]
    %v254 = vld [vmem:[#allocation8 + $0x70] sm:$0xf]
    %v255 = vld [vmem:[#allocation8 + $0x74] sm:$0xf]
    %v256 = vld [vmem:[#allocation8 + $0x78] sm:$0xf]
    %v257 = vld [vmem:[#allocation8 + $0x7c] sm:$0xf]
    %v258 = vld [vmem:[%s4] sm:$0x1]
    %v260 = vperm.slane %v258, 0
    %v294 = vunpack.c.l.b16 %v226
    %v295 = vunpack.c.l.b16 %v227
    %v296 = vunpack.c.l.b16 %v228
    %v297 = vunpack.c.l.b16 %v229
    %v298 = vunpack.c.l.b16 %v230
    %v299 = vunpack.c.l.b16 %v231
    %v300 = vunpack.c.l.b16 %v232
    %v301 = vunpack.c.l.b16 %v233
    %v302 = vunpack.c.l.b16 %v234
    %v303 = vunpack.c.l.b16 %v235
    %v304 = vunpack.c.l.b16 %v236
    %v305 = vunpack.c.l.b16 %v237
    %v306 = vunpack.c.l.b16 %v238
    %v307 = vunpack.c.l.b16 %v239
    %v308 = vunpack.c.l.b16 %v240
    %v309 = vunpack.c.l.b16 %v241
    %v310 = vunpack.c.l.b16 %v242
    %v311 = vunpack.c.l.b16 %v243
    %v312 = vunpack.c.l.b16 %v244
    %v313 = vunpack.c.l.b16 %v245
    %v314 = vunpack.c.l.b16 %v246
    %v315 = vunpack.c.l.b16 %v247
    %v316 = vunpack.c.l.b16 %v248
    %v317 = vunpack.c.l.b16 %v249
    %v318 = vunpack.c.l.b16 %v250
    %v319 = vunpack.c.l.b16 %v251
    %v320 = vunpack.c.l.b16 %v252
    %v321 = vunpack.c.l.b16 %v253
    %v322 = vunpack.c.l.b16 %v254
    %v323 = vunpack.c.l.b16 %v255
    %v324 = vunpack.c.l.b16 %v256
    %v325 = vunpack.c.l.b16 %v257
    %v326 = vpack.c.b16 %v295, %v294
    %v327 = vpack.c.b16 %v297, %v296
    %v328 = vpack.c.b16 %v299, %v298
    %v329 = vpack.c.b16 %v301, %v300
    %v330 = vpack.c.b16 %v303, %v302
    %v331 = vpack.c.b16 %v305, %v304
    %v332 = vpack.c.b16 %v307, %v306
    %v333 = vpack.c.b16 %v309, %v308
    %v334 = vpack.c.b16 %v311, %v310
    %v335 = vpack.c.b16 %v313, %v312
    %v336 = vpack.c.b16 %v315, %v314
    %v337 = vpack.c.b16 %v317, %v316
    %v338 = vpack.c.b16 %v319, %v318
    %v339 = vpack.c.b16 %v321, %v320
    %v340 = vpack.c.b16 %v323, %v322
    %v341 = vpack.c.b16 %v325, %v324
    %358 = vmatpush.bf16.msra.mxu0 %v333
    %359 = vmatpush.bf16.msra.mxu0 %v332
    %360 = vmatpush.bf16.msra.mxu0 %v331
    %361 = vmatpush.bf16.msra.mxu0 %v330
    %362 = vmatpush.bf16.msra.mxu0 %v329
    %363 = vmatpush.bf16.msra.mxu0 %v328
    %364 = vmatpush.bf16.msra.mxu0 %v327
    %365 = vmatpush.bf16.msra.mxu0 %v326
    %366 = vmatmul.bf16.gmra.mxu0 %v224
    %v367 = vpop.f32.mrf.mxu0
    %v368 = vadd.f32 %v260, %v367
    %v369 = vpop.f32.mrf.mxu0
    %v370 = vadd.f32 %v260, %v369
    %371 = vdwg.mxu0
    %372 = vmatpush.bf16.msra.mxu0 %v341
    %373 = vmatpush.bf16.msra.mxu0 %v340
    %374 = vmatpush.bf16.msra.mxu0 %v339
    %375 = vmatpush.bf16.msra.mxu0 %v338
    %376 = vmatpush.bf16.msra.mxu0 %v337
    %377 = vmatpush.bf16.msra.mxu0 %v336
    %378 = vmatpush.bf16.msra.mxu0 %v335
    %379 = vmatpush.bf16.msra.mxu0 %v334
    %380 = vmatmul.bf16.gmra.mxu0 %v225
    %v381 = vpop.f32.mrf.mxu0
    %v382 = vadd.f32 %v368, %v381
    %v383 = vpop.f32.mrf.mxu0
    %v384 = vadd.f32 %v370, %v383
    %385 = vdwg.mxu0
    %386 = vst [vmem:[#allocation10] sm:$0xff] %v382
    %387 = vst [vmem:[#allocation10 + $0x8] sm:$0xff] %v384
    // Predicated region
    $region38: #{tpu_custom_call.1} parent=1 // pred_check
      _
    $region39: #{tpu_custom_call.1} parent=1 // pred_check_branch
      %389 = sbr.rel (0) target = $region41
    $region40: #{tpu_custom_call.1} parent=1 // pred_region
      %391 = vsyncadd [#allocation4], 0
      %s392 = sshll.u32 [#allocation10], 4
      %s393 = int_to_ptr.vmem [resolvable:$true] %s392
      %s394 = sshll.u32 %s5, 4
      %s395 = int_to_ptr.hbm [resolvable:$true] %s394
      %400 = dma.vmem_to_hbm [thread:$0]  %s393, 256, %s395, [#allocation4], 128, 128, 8
    $region41: #{tpu_custom_call.1} parent=1 // pred_fallthru
      _
    // Predicated region
    $region42: #{tpu_custom_call.1} parent=1 // pred_check
      _
    $region43: #{tpu_custom_call.1} parent=1 // pred_check_branch
      %402 = sbr.rel (0) target = $region45
    $region44: #{tpu_custom_call.1} parent=1 // pred_region
      %404 = dma.done [#allocation4], 256
    $region45: #{tpu_custom_call.1} parent=1 // pred_fallthru
      _
    %405 = vsyncpa [#allocation3], 1
    %406 = vsyncpa [#allocation6], 1
    %407 = vsyncpa [#allocation9], 1
    %408 = vsyncpa [#allocation4], 1

</llo_original>
